<compile_context>
chip_gen: v5e
topology: v5e:2x2
jax: 0.10.0
libtpu: 0.0.40
codegen_flags: <defaults>
</compile_context>

<pallas_src>
import functools

import numpy as np
import jax
import jax.numpy as jnp
from jax.experimental import pallas as pl
from jax.experimental.pallas import tpu as pltpu


def _round_up(x, m):
    return ((x + m - 1) // m) * m


def _fcnet_kernel(x_ref, w_ref, ssum_ref, sbc_ref, o_ref, *, normalize):
    """One batch tile of the fused multi-view projection.

    x_ref    : (TB, K)  compute dtype — all views' features concatenated (zero padded)
    w_ref    : (K, N)   compute dtype — block-diagonal, pre-transposed, lane-packed weights
    ssum_ref : (N, Vp)  f32 — one-hot segment-sum matrix (lane -> view)
    sbc_ref  : (Vp, N)  f32 — one-hot segment-broadcast matrix (view -> lane)
    o_ref    : (TB, N)  f32 — lane-packed outputs (view i in lanes [i*L, (i+1)*L))
    """
    y = jnp.dot(x_ref[...], w_ref[...], preferred_element_type=jnp.float32)
    if normalize:
        # Per-view L2 normalisation without sub-128-lane slicing: segment sums and
        # the broadcast back to lanes are two tiny MXU matmuls; rsqrt is on the EUP.
        ss = jnp.dot(y * y, ssum_ref[...], preferred_element_type=jnp.float32)
        inv = jax.lax.rsqrt(jnp.maximum(ss, 1e-24))       # == 1 / max(||y||, 1e-12)
        y = y * jnp.dot(inv, sbc_ref[...], preferred_element_type=jnp.float32)
    o_ref[...] = y.astype(o_ref.dtype)


def _build_forward(feat_dims, latent_dim, normalize, compute_dtype, tile_rows=512):
    feat_dims = tuple(int(f) for f in feat_dims)
    V = len(feat_dims)
    L = int(latent_dim)
    fp = tuple(_round_up(f, 128) for f in feat_dims)   # per-view lane-aligned K slab
    K = sum(fp)
    N = _round_up(V * L, 128)                          # lane-packed output width
    Vp = _round_up(V, 128)
    dsize = jnp.dtype(compute_dtype).itemsize
    sub = 8 * (4 // dsize)                             # sublane multiple (16 for bf16, 8 for f32)

    kernel = functools.partial(_fcnet_kernel, normalize=normalize)

    def forward(w_cat, ssum, sbc, *xs):
        B = xs[0].shape[0]
        Bp = _round_up(B, sub)

        # Batch tile: as big as possible while double-buffered x/out tiles plus the
        # resident weights stay comfortably inside the default scoped-VMEM budget.
        bytes_per_row = K * dsize + N * 4
        vmem_rows = max(sub, ((8 * 1024 * 1024) // (2 * bytes_per_row)) // sub * sub)
        TB = min(Bp, tile_rows, vmem_rows)

        # Pad each view to its lane-aligned slab and concatenate along features.
        # Runs under jit; allow_input_fusion lets XLA fold it into the operand.
        xp = [
            jnp.pad(x.astype(compute_dtype),
                    ((0, Bp - B), (0, fp[i] - feat_dims[i])))
            for i, x in enumerate(xs)
        ]
        x_cat = xp[0] if V == 1 else jnp.concatenate(xp, axis=1)   # (Bp, K)

        flops = 2 * Bp * K * N + (4 * Bp * N * Vp if normalize else 0)
        bytes_accessed = (Bp * K * dsize + K * N * dsize
                          + 2 * N * Vp * 4 + Bp * N * 4)

        out = pl.pallas_call(
            kernel,
            out_shape=jax.ShapeDtypeStruct((Bp, N), jnp.float32),
            grid=(pl.cdiv(Bp, TB),),
            in_specs=[
                pl.BlockSpec((TB, K), lambda b: (b, 0)),   # batch-tiled activations
                pl.BlockSpec((K, N), lambda b: (0, 0)),    # weights: VMEM-resident across tiles
                pl.BlockSpec((N, Vp), lambda b: (0, 0)),
                pl.BlockSpec((Vp, N), lambda b: (0, 0)),
            ],
            out_specs=pl.BlockSpec((TB, N), lambda b: (b, 0)),
            compiler_params=pltpu.CompilerParams(
                dimension_semantics=("parallel",),          # batch tiles shard across TCs (v7x)
                allow_input_fusion=[True, False, False, False],
            ),
            cost_estimate=pl.CostEstimate(
                flops=int(flops),
                transcendentals=int(Bp * V) if normalize else 0,
                bytes_accessed=int(bytes_accessed),
            ),
        )(x_cat, w_cat, ssum, sbc)

        # Un-pack the lane-dense output into per-view (B, L) slices (still under jit).
        return tuple(out[:B, i * L:(i + 1) * L] for i in range(V))

    return jax.jit(forward)


class FCNetPallas:
    """JAX/Pallas equivalent of FCNet: per-view bias-free Linear + optional L2 norm.

    All views are fused into a single block-diagonal matmul with lane-packed outputs;
    the entire forward (pad/concat, kernel, per-view un-pack) runs under one jax.jit.
    """

    def __init__(self, feat_dims=(100, 100), latent_dim=64, normalize=True,
                 compute_dtype=jnp.bfloat16, key=None):
        if key is None:
            key = jax.random.PRNGKey(0)
        self.feat_dims = tuple(int(f) for f in feat_dims)
        self.num_view = len(self.feat_dims)
        self.latent_dim = int(latent_dim)
        self.normalize = bool(normalize)
        self.compute_dtype = compute_dtype

        V, L = self.num_view, self.latent_dim
        fp = tuple(_round_up(f, 128) for f in self.feat_dims)
        K = sum(fp)
        N = _round_up(V * L, 128)
        Vp = _round_up(V, 128)

        # Per-view torch-layout weights (L, F) with nn.Linear's kaiming-uniform bound.
        self.weights = []
        for fd in self.feat_dims:
            key, k2 = jax.random.split(key)
            bound = 1.0 / float(np.sqrt(fd))
            self.weights.append(jax.random.uniform(
                k2, (L, fd), minval=-bound, maxval=bound, dtype=jnp.float32))

        # Block-diagonal, pre-transposed, lane-packed weight slab (K, N):
        # view i's W^T occupies rows [k_i, k_i + fd_i) and lanes [i*L, (i+1)*L).
        # Off-diagonal blocks stay exactly zero, so views cannot leak into each other.
        w_cat = np.zeros((K, N), np.float32)
        k = 0
        for i, fd in enumerate(self.feat_dims):
            w_cat[k:k + fd, i * L:(i + 1) * L] = np.asarray(self.weights[i]).T
            k += fp[i]
        self.w_cat = jnp.asarray(w_cat).astype(compute_dtype)

        # One-hot segment matrices used for the per-view L2 norm inside the kernel.
        ssum = np.zeros((N, Vp), np.float32)
        sbc = np.zeros((Vp, N), np.float32)
        for i in range(V):
            ssum[i * L:(i + 1) * L, i] = 1.0
            sbc[i, i * L:(i + 1) * L] = 1.0
        self.ssum = jnp.asarray(ssum)
        self.sbc = jnp.asarray(sbc)

        self._forward = _build_forward(self.feat_dims, L, self.normalize, compute_dtype)

    def __call__(self, xs):
        assert len(xs) == self.num_view, "expected one activation per view"
        B = xs[0].shape[0]
        for i, x in enumerate(xs):
            assert x.shape == (B, self.feat_dims[i]), "activation shape mismatch"
        return list(self._forward(self.w_cat, self.ssum, self.sbc, *xs))


if __name__ == "__main__":
    key = jax.random.PRNGKey(0)
    batch = 8
    feat_dims = (100, 100)
    latent_dim = 64

    xs = []
    for fd in feat_dims:
        key, k2 = jax.random.split(key)
        xs.append(jax.random.normal(k2, (batch, fd), dtype=jnp.float32))

    # f64 host reference (PyTorch semantics: y = x @ W^T; y /= max(||y||, 1e-12)).
    def ref_forward(weights, xs_, normalize):
        res = []
        for w, x in zip(weights, xs_):
            y = np.asarray(x, np.float64) @ np.asarray(w, np.float64).T
            if normalize:
                y = y / np.maximum(np.linalg.norm(y, axis=1, keepdims=True), 1e-12)
            res.append(y)
        return res

    # Main model: bf16 MXU inputs, f32 accumulate + f32 normalisation.
    model = FCNetPallas(feat_dims, latent_dim, normalize=True,
                        compute_dtype=jnp.bfloat16, key=jax.random.PRNGKey(0))
    outs = model(xs)
    jax.block_until_ready(outs)

    refs = ref_forward(model.weights, xs, True)
    assert all(o.shape == (batch, latent_dim) for o in outs)
    for o, r in zip(outs, refs):
        assert np.allclose(np.linalg.norm(np.asarray(o), axis=1), 1.0, atol=1e-3), \
            "rows not L2-normalized"
        assert np.allclose(np.asarray(o), r, atol=3e-2), "bf16 output mismatch vs reference"

    # f32 compute path (tight tolerance).
    model32 = FCNetPallas(feat_dims, latent_dim, normalize=True,
                          compute_dtype=jnp.float32, key=jax.random.PRNGKey(0))
    outs32 = model32(xs)
    jax.block_until_ready(outs32)
    for o, r in zip(outs32, ref_forward(model32.weights, xs, True)):
        assert np.allclose(np.asarray(o), r, atol=2e-4), "f32 output mismatch vs reference"

    # normalize=False branch.
    model_nn = FCNetPallas(feat_dims, latent_dim, normalize=False,
                           compute_dtype=jnp.float32, key=jax.random.PRNGKey(0))
    outs_nn = model_nn(xs)
    jax.block_until_ready(outs_nn)
    for o, r in zip(outs_nn, ref_forward(model_nn.weights, xs, False)):
        assert np.allclose(np.asarray(o), r, atol=2e-4), "no-norm output mismatch vs reference"

    print("KERNEL_OK")
</pallas_src>

<mosaic_0001>
module attributes {stable_mosaic.version = 11 : i64} {
  func.func @_fcnet_kernel(%arg0: i32, %arg1: memref<16x256xbf16, #tpu.memory_space<vmem>>, %arg2: memref<256x128xbf16, #tpu.memory_space<vmem>>, %arg3: memref<128x128xf32, #tpu.memory_space<vmem>>, %arg4: memref<128x128xf32, #tpu.memory_space<vmem>>, %arg5: memref<16x128xf32, #tpu.memory_space<vmem>>) attributes {dimension_semantics = [#tpu.dimension_semantics<parallel>], iteration_bounds = array<i64: 1>, scalar_prefetch = 0 : i64, scratch_operands = 0 : i64, tpu.core_type = #tpu.core_type<tc>, window_params = [{transform_indices = @transform_0, window_bounds = array<i64: 16, 256>}, {pipeline_mode = #tpu.pipeline_mode<synchronous>, transform_indices = @transform_1, window_bounds = array<i64: 256, 128>}, {pipeline_mode = #tpu.pipeline_mode<synchronous>, transform_indices = @transform_2, window_bounds = array<i64: 128, 128>}, {pipeline_mode = #tpu.pipeline_mode<synchronous>, transform_indices = @transform_3, window_bounds = array<i64: 128, 128>}, {transform_indices = @transform_4, window_bounds = array<i64: 16, 128>}]} {
    %c0 = arith.constant 0 : index
    %c0_0 = arith.constant 0 : index
    %0 = vector.load %arg1[%c0, %c0_0] : memref<16x256xbf16, #tpu.memory_space<vmem>>, vector<16x256xbf16>
    %c0_1 = arith.constant 0 : index
    %c0_2 = arith.constant 0 : index
    %1 = vector.load %arg2[%c0_1, %c0_2] : memref<256x128xbf16, #tpu.memory_space<vmem>>, vector<256x128xbf16>
    %cst = arith.constant dense<0.000000e+00> : vector<16x128xf32>
    %2 = tpu.matmul %0, %1, %cst {dimension_numbers = #tpu.dot_dimension_numbers<[1], [0], [0], [1], [0, 0, 1, 1], [], []>} : vector<16x256xbf16>, vector<256x128xbf16>, vector<16x128xf32> -> vector<16x128xf32>
    %3 = arith.mulf %2, %2 : vector<16x128xf32>
    %c0_3 = arith.constant 0 : index
    %c0_4 = arith.constant 0 : index
    %4 = vector.load %arg3[%c0_3, %c0_4] : memref<128x128xf32, #tpu.memory_space<vmem>>, vector<128x128xf32>
    %cst_5 = arith.constant dense<0.000000e+00> : vector<16x128xf32>
    %5 = tpu.matmul %3, %4, %cst_5 {dimension_numbers = #tpu.dot_dimension_numbers<[1], [0], [0], [1], [0, 0, 1, 1], [], []>} : vector<16x128xf32>, vector<128x128xf32>, vector<16x128xf32> -> vector<16x128xf32>
    %cst_6 = arith.constant 1.000000e-24 : f32
    %6 = vector.broadcast %cst_6 : f32 to vector<16x128xf32>
    %7 = arith.maximumf %5, %6 : vector<16x128xf32>
    %8 = math.rsqrt %7 : vector<16x128xf32>
    %c0_7 = arith.constant 0 : index
    %c0_8 = arith.constant 0 : index
    %9 = vector.load %arg4[%c0_7, %c0_8] : memref<128x128xf32, #tpu.memory_space<vmem>>, vector<128x128xf32>
    %cst_9 = arith.constant dense<0.000000e+00> : vector<16x128xf32>
    %10 = tpu.matmul %8, %9, %cst_9 {dimension_numbers = #tpu.dot_dimension_numbers<[1], [0], [0], [1], [0, 0, 1, 1], [], []>} : vector<16x128xf32>, vector<128x128xf32>, vector<16x128xf32> -> vector<16x128xf32>
    %11 = arith.mulf %2, %10 : vector<16x128xf32>
    %c0_10 = arith.constant 0 : index
    %c0_11 = arith.constant 0 : index
    %12 = vector.load %arg5[%c0_10, %c0_11] : memref<16x128xf32, #tpu.memory_space<vmem>>, vector<16x128xf32>
    tpu.vector_store %arg5[%c0_10, %c0_11], %11 {strides = array<i32>} : memref<16x128xf32, #tpu.memory_space<vmem>>, vector<16x128xf32>,
    return
  }
  func.func @transform_0(%arg0: i32) -> (i32, i32) {
    %c0_i32 = arith.constant 0 : i32
    %c0_i32_0 = arith.constant 0 : i32
    return %arg0, %c0_i32 : i32, i32
  }
  func.func @transform_1(%arg0: i32) -> (i32, i32) {
    %c0_i32 = arith.constant 0 : i32
    %c0_i32_0 = arith.constant 0 : i32
    %c0_i32_1 = arith.constant 0 : i32
    return %c0_i32, %c0_i32_0 : i32, i32
  }
  func.func @transform_2(%arg0: i32) -> (i32, i32) {
    %c0_i32 = arith.constant 0 : i32
    %c0_i32_0 = arith.constant 0 : i32
    %c0_i32_1 = arith.constant 0 : i32
    return %c0_i32, %c0_i32_0 : i32, i32
  }
  func.func @transform_3(%arg0: i32) -> (i32, i32) {
    %c0_i32 = arith.constant 0 : i32
    %c0_i32_0 = arith.constant 0 : i32
    %c0_i32_1 = arith.constant 0 : i32
    return %c0_i32, %c0_i32_0 : i32, i32
  }
  func.func @transform_4(%arg0: i32) -> (i32, i32) {
    %c0_i32 = arith.constant 0 : i32
    %c0_i32_0 = arith.constant 0 : i32
    return %arg0, %c0_i32 : i32, i32
  }
}

</mosaic_0001>

<llo_original>
// kernel: forward.2
$region0: #{forward.2}
  #allocation0 [shape = 'u32[]', space=smem, size = 0x4, offset = 0x4, fixed_abs, tag = 'smem constant byte address 0x4 - core index']
  #allocation1 [shape = 'u32[72,128]{1,0:T(1,128)}', space=vmem, size = 0x9000, scoped, tag = 'internal scratch']
  #allocation2 [shape = 'u32[2048]{0}', space=vmem, size = 0x2000, scoped, tag = 'scoped memory for forward.2']
  #allocation3 [shape = 'u32[2048]{0}', space=vmem, size = 0x2000, scoped, tag = 'scoped memory for forward.2']
  #allocation4 [shape = 'u32[2048]{0}', space=vmem, size = 0x2000, scoped, tag = 'scoped memory for forward.2']
  #allocation5 [shape = 'u32[2048]{0}', space=vmem, size = 0x2000, scoped, tag = 'scoped memory for forward.2']
  #allocation6 [shape = 'u32[2048]{0}', space=vmem, size = 0x2000, scoped, tag = 'scoped memory for forward.2']
  #allocation7 [shape = 'u32[2048]{0}', space=vmem, size = 0x2000, scoped, tag = 'scoped memory for forward.2']
  #allocation8 [shape = 'u32[2048]{0}', space=vmem, size = 0x2000, scoped, tag = 'scoped memory for forward.2']
  #allocation9 [shape = 'u32[2048]{0}', space=vmem, size = 0x2000, scoped, tag = 'scoped memory for forward.2']
  #allocation10 [shape = 'u32[2048]{0}', space=vmem, size = 0x2000, scoped, tag = 'scoped memory for forward.2']
  #allocation11 [shape = 'u32[2048]{0}', space=vmem, size = 0x2000, scoped, tag = 'scoped memory for forward.2']
  %s0 = inlined_call_operand.hbm [shape: bf16[256,128], index: 0, kind: input, shape index: {}]
  %s1 = inlined_call_operand.hbm [shape: f32[128,128], index: 1, kind: input, shape index: {}]
  %s2 = inlined_call_operand.hbm [shape: f32[128,128], index: 2, kind: input, shape index: {}]
  %s3 = inlined_call_operand.vmem [shape: bf16[8,100], index: 3, kind: input, shape index: {}]
  %s4 = inlined_call_operand.<no memory space> [shape: bf16[], index: 4, kind: input, shape index: {}]
  %s5 = inlined_call_operand.<no memory space> [shape: s32[], index: 5, kind: input, shape index: {}]
  %s6 = inlined_call_operand.vmem [shape: bf16[8,100], index: 6, kind: input, shape index: {}]
  %s7 = inlined_call_operand.<no memory space> [shape: bf16[], index: 7, kind: input, shape index: {}]
  %s8 = inlined_call_operand.vmem [shape: f32[16,128], index: 8, kind: output, shape index: {}]
  %s9 = sld [smem:[#allocation0]]
  $region42: #{forward.2} parent=0
    _
  %s11 = ssub.s32 1, %s9
  %s12 = scalar_select 0, %s11, %s9
  %v13 = vstv %s4
  %v14 = vunpack.i.l.bf16 %v13
  %v16 = vunpack.i.h.bf16 %v13
  %v18 = vstv %s5
  %v19 = vstv %s4
  %v20 = vunpack.i.l.bf16 %v19
  %v22 = vunpack.i.h.bf16 %v19
  %v24 = vstv %s7
  %v25 = vunpack.i.l.bf16 %v24
  %v27 = vunpack.i.h.bf16 %v24
  $region1: #{forward.2} parent=0
    #allocation12 [shape = 'u8[65536]{0}', space=vmem, size = 0x10000, scoped, tag = 'input window, operand 1, single buffered']
    #allocation13 [shape = 's32[1]{0}', space=sflag, size = 0x4, scoped, tag = 'scoped memory for forward.2']
    #allocation14 [shape = 'u8[65536]{0}', space=vmem, size = 0x10000, scoped, tag = 'input window, operand 2, single buffered']
    #allocation15 [shape = 's32[1]{0}', space=sflag, size = 0x4, scoped, tag = 'scoped memory for forward.2']
    #allocation16 [shape = 'u8[65536]{0}', space=vmem, size = 0x10000, scoped, tag = 'input window, operand 3, single buffered']
    #allocation17 [shape = 'u8[8192]{0}', space=vmem, size = 0x2000, dematerialized = true, scoped, tag = 'FusionAdapter Buffer %fusion.4 = bf16[16,256]{1,0:T(8,128)(2,1)} fusion(%param_3.15, %param_4.11, %param_5.5, %param_6.5, %param_7.3), kind=kLoop, calls=%fused_computation.4.clone.clone, metadata={op_name="jit(forward)/concatenate" stack_frame_id=10}']
    %29 = vsyncpa [#allocation13], 0
    %30 = vsyncpa [#allocation15], 0
    // Predicated region
    $region2: #{forward.2} parent=1 // pred_check
      _
    $region3: #{forward.2} parent=1 // pred_check_branch
      %32 = sbr.rel (0) target = $region5
    $region4: #{forward.2} parent=1 // pred_region
      %s34 = ssub.s32 1, 0
      %s35 = smul.u32 4, %s34
      %p36 = scmp.lt.s32.totalorder 0, 0
      %s37 = scalar_select %p36, 0, 0
      %s38 = smul.addr %s37, 4
      %s39 = scalar_lea.vmem %s3, %s38
      %s41 = ssub.s32 1, 0
      %s42 = smul.u32 4, %s41
    $region5: #{forward.2} parent=1 // pred_fallthru
      _
    // Predicated region
    $region6: #{forward.2} parent=1 // pred_check
      _
    $region7: #{forward.2} parent=1 // pred_check_branch
      %44 = sbr.rel (0) target = $region9
    $region8: #{forward.2} parent=1 // pred_region
      _
    $region9: #{forward.2} parent=1 // pred_fallthru
      _
    // Predicated region
    $region10: #{forward.2} parent=1 // pred_check
      _
    $region11: #{forward.2} parent=1 // pred_check_branch
      %46 = sbr.rel (0) target = $region13
    $region12: #{forward.2} parent=1 // pred_region
      %48 = vsyncadd [#allocation13], 0
      %s49 = sshll.u32 %s0, 4
      %s50 = int_to_ptr.hbm [resolvable:$true] %s49
      %s51 = sshll.u32 [#allocation12], 4
      %s52 = int_to_ptr.vmem [resolvable:$true] %s51
      %57 = dma.hbm_to_vmem [thread:$0]  %s50, 2048, %s52, [#allocation13], 64, 64, 4
    $region13: #{forward.2} parent=1 // pred_fallthru
      _
    // Predicated region
    $region14: #{forward.2} parent=1 // pred_check
      _
    $region15: #{forward.2} parent=1 // pred_check_branch
      %59 = sbr.rel (0) target = $region17
    $region16: #{forward.2} parent=1 // pred_region
      %61 = vsyncadd [#allocation15], 0
      %s62 = sshll.u32 %s1, 4
      %s63 = int_to_ptr.hbm [resolvable:$true] %s62
      %s64 = sshll.u32 [#allocation14], 4
      %s65 = int_to_ptr.vmem [resolvable:$true] %s64
      %70 = dma.hbm_to_vmem [thread:$0]  %s63, 2048, %s65, [#allocation15], 128, 128, 8
    $region17: #{forward.2} parent=1 // pred_fallthru
      _
    // Predicated region
    $region18: #{forward.2} parent=1 // pred_check
      _
    $region19: #{forward.2} parent=1 // pred_check_branch
      %72 = sbr.rel (0) target = $region21
    $region20: #{forward.2} parent=1 // pred_region
      %74 = vsyncadd [#allocation15], 0
      %s75 = sshll.u32 %s2, 4
      %s76 = int_to_ptr.hbm [resolvable:$true] %s75
      %s77 = sshll.u32 [#allocation16], 4
      %s78 = int_to_ptr.vmem [resolvable:$true] %s77
      %83 = dma.hbm_to_vmem [thread:$0]  %s76, 2048, %s78, [#allocation15], 128, 128, 8
    $region21: #{forward.2} parent=1 // pred_fallthru
      _
    // Predicated region
    $region22: #{forward.2} parent=1 // pred_check
      _
    $region23: #{forward.2} parent=1 // pred_check_branch
      %85 = sbr.rel (0) target = $region25
    $region24: #{forward.2} parent=1 // pred_region
      %87 = dma.done [#allocation13], 2048
    $region25: #{forward.2} parent=1 // pred_fallthru
      _
    // Predicated region
    $region26: #{forward.2} parent=1 // pred_check
      _
    $region27: #{forward.2} parent=1 // pred_check_branch
      %89 = sbr.rel (0) target = $region29
    $region28: #{forward.2} parent=1 // pred_region
      %91 = dma.done [#allocation15], 2048
    $region29: #{forward.2} parent=1 // pred_fallthru
      _
    // Predicated region
    $region30: #{forward.2} parent=1 // pred_check
      _
    $region31: #{forward.2} parent=1 // pred_check_branch
      %93 = sbr.rel (0) target = $region33
    $region32: #{forward.2} parent=1 // pred_region
      %95 = dma.done [#allocation15], 2048
    $region33: #{forward.2} parent=1 // pred_fallthru
      _
    %s97 = ssub.s32 1, 0
    %s98 = smul.u32 4, %s97
    %p99 = scmp.lt.s32.totalorder 0, 0
    %s100 = scalar_select %p99, 0, 0
    %s101 = smul.addr %s100, 4
    %s102 = scalar_lea.vmem %s3, %s101
    %s104 = ssub.s32 1, 0
    %s105 = smul.u32 4, %s104
    %p106 = scmp.lt.s32.totalorder 0, 0
    %s107 = scalar_select %p106, 0, 0
    %s108 = smul.addr %s107, 4
    %s109 = scalar_lea.vmem %s3, %s108
    %s111 = ssub.s32 1, 0
    %s112 = smul.u32 4, %s111
    %s113 = ssub.s32 0, 0
    %p114 = scmp.lt.s32.totalorder %s113, 0
    %s115 = scalar_select %p114, 0, 255
    %s116 = sshrl.u32 %s115, 1
    %s117 = sor.u32 %s115, %s116
    %s118 = sand.u32 %s117, 85
    %s119 = sshrl.u32 %s118, 1
    %s120 = sor.u32 %s118, %s119
    %s121 = sand.u32 51, %s120
    %s122 = sshrl.u32 %s121, 2
    %s123 = sor.u32 %s121, %s122
    %s124 = sand.u32 15, %s123
    %v125 = vld [vmem:[%s109] sm:%s124]
    %v126 = vunpack.c.l.bf16 %v125
    %v127 = vunpack.c.h.bf16 %v125
    %s129 = sor.u32 255, 127
    %s130 = sand.u32 %s129, 85
    %s131 = sshrl.u32 %s130, 1
    %s132 = sor.u32 %s130, %s131
    %s133 = sand.u32 51, %s132
    %s134 = sshrl.u32 %s133, 2
    %s135 = sor.u32 %s133, %s134
    %s136 = sand.u32 15, %s135
    %v137 = vld [vmem:[%s6] sm:%s136]
    %v138 = vunpack.c.l.bf16 %v137
    %v139 = vunpack.c.h.bf16 %v137
    %v140 = vlaneseq
    %v141 = vand.u32 %v140, 127
    %vm143 = vcmp.lt.s32.totalorder %v141, 100
    %v144 = vsel %vm143, %v138, %v20
    %v145 = vlaneseq
    %v146 = vand.u32 %v145, 127
    %149 = xla_tuple %v146, %v18
    %150 = xla_tuple %149
    %vm151 = vcmp.lt.s32.totalorder %v146, %v18
    %v152 = vsel %vm151, 1, 0
    %153 = xla_tuple %v152
    %154 = xla_tuple %v152, %v144, %v25
    %155 = xla_tuple %154
    %v156 = vsel %vm151, %v144, %v25
    %157 = xla_tuple %v156
    %v158 = vlaneseq
    %v159 = vand.u32 %v158, 127
    %162 = xla_tuple %v159, %v18
    %163 = xla_tuple %162
    %vm164 = vcmp.ge.s32.totalorder %v159, %v18
    %v165 = vsel %vm164, 1, 0
    %166 = xla_tuple %v165
    %167 = xla_tuple %v165, %v14, %v25
    %168 = xla_tuple %167
    %v169 = vsel %vm164, %v14, %v25
    %170 = xla_tuple %v169
    %171 = xla_tuple %v156, %v169
    %172 = xla_tuple %171
    %v173 = vmax.f32 %v156, %v169
    %174 = xla_tuple %v173
    %v175 = vpack.c.bf16 0.0, %v173
    %s177 = ssub.s32 16, 1
    %178 = vst [vmem:[#allocation17] sm:%s177] %v175
    %v179 = vlaneseq
    %v180 = vand.u32 %v179, 127
    %v181 = vadd.s32 %v180, 128
    %vm182 = vcmp.lt.s32.totalorder %v181, 228
    %v183 = vsel %vm182, %v126, %v14
    %v184 = vlaneseq
    %v185 = vand.u32 %v184, 127
    %v187 = vadd.s32 %v185, 128
    %188 = xla_tuple %v187, %v18
    %189 = xla_tuple %188
    %vm190 = vcmp.lt.s32.totalorder %v187, %v18
    %v191 = vsel %vm190, 1, 0
    %192 = xla_tuple %v191
    %193 = xla_tuple %v191, %v20, %v25
    %194 = xla_tuple %193
    %v195 = vsel %vm190, %v20, %v25
    %196 = xla_tuple %v195
    %v197 = vlaneseq
    %v198 = vand.u32 %v197, 127
    %v200 = vadd.s32 %v198, 128
    %201 = xla_tuple %v200, %v18
    %202 = xla_tuple %201
    %vm203 = vcmp.ge.s32.totalorder %v200, %v18
    %v204 = vsel %vm203, 1, 0
    %205 = xla_tuple %v204
    %206 = xla_tuple %v204, %v183, %v25
    %207 = xla_tuple %206
    %v208 = vsel %vm203, %v183, %v25
    %209 = xla_tuple %v208
    %210 = xla_tuple %v195, %v208
    %211 = xla_tuple %210
    %v212 = vmax.f32 %v195, %v208
    %213 = xla_tuple %v212
    %s214 = scalar_lea.vmem [#allocation17], 4
    %v215 = vpack.c.bf16 0.0, %v212
    %s217 = ssub.s32 16, 1
    %218 = vst [vmem:[%s214] sm:%s217] %v215
    %v219 = vlaneseq
    %v220 = vand.u32 %v219, 127
    %223 = xla_tuple %v220, %v18
    %224 = xla_tuple %223
    %vm225 = vcmp.lt.s32.totalorder %v220, %v18
    %v226 = vsel %vm225, 1, 0
    %227 = xla_tuple %v226
    %228 = xla_tuple %v226, %v20, %v25
    %229 = xla_tuple %228
    %v230 = vsel %vm225, %v20, %v25
    %231 = xla_tuple %v230
    %v232 = vlaneseq
    %v233 = vand.u32 %v232, 127
    %236 = xla_tuple %v233, %v18
    %237 = xla_tuple %236
    %vm238 = vcmp.ge.s32.totalorder %v233, %v18
    %v239 = vsel %vm238, 1, 0
    %240 = xla_tuple %v239
    %241 = xla_tuple %v239, %v14, %v25
    %242 = xla_tuple %241
    %v243 = vsel %vm238, %v14, %v25
    %244 = xla_tuple %v243
    %245 = xla_tuple %v230, %v243
    %246 = xla_tuple %245
    %v247 = vmax.f32 %v230, %v243
    %248 = xla_tuple %v247
    %s249 = scalar_lea.vmem [#allocation17], 8
    %v250 = vpack.c.bf16 0.0, %v247
    %s252 = ssub.s32 16, 1
    %253 = vst [vmem:[%s249] sm:%s252] %v250
    %v254 = vlaneseq
    %v255 = vand.u32 %v254, 127
    %v257 = vadd.s32 %v255, 128
    %258 = xla_tuple %v257, %v18
    %259 = xla_tuple %258
    %vm260 = vcmp.lt.s32.totalorder %v257, %v18
    %v261 = vsel %vm260, 1, 0
    %262 = xla_tuple %v261
    %263 = xla_tuple %v261, %v20, %v25
    %264 = xla_tuple %263
    %v265 = vsel %vm260, %v20, %v25
    %266 = xla_tuple %v265
    %v267 = vlaneseq
    %v268 = vand.u32 %v267, 127
    %v270 = vadd.s32 %v268, 128
    %271 = xla_tuple %v270, %v18
    %272 = xla_tuple %271
    %vm273 = vcmp.ge.s32.totalorder %v270, %v18
    %v274 = vsel %vm273, 1, 0
    %275 = xla_tuple %v274
    %276 = xla_tuple %v274, %v14, %v25
    %277 = xla_tuple %276
    %v278 = vsel %vm273, %v14, %v25
    %279 = xla_tuple %v278
    %280 = xla_tuple %v265, %v278
    %281 = xla_tuple %280
    %v282 = vmax.f32 %v265, %v278
    %283 = xla_tuple %v282
    %s284 = scalar_lea.vmem [#allocation17], 12
    %v285 = vpack.c.bf16 0.0, %v282
    %s287 = ssub.s32 16, 1
    %288 = vst [vmem:[%s284] sm:%s287] %v285
    %v289 = vld [vmem:[#allocation17] sm:$0xff]
    %v290 = vld [vmem:[#allocation17 + $0x8] sm:$0xff]
    %v291 = vld [vmem:[#allocation12] sm:$0xf]
    %v292 = vld [vmem:[#allocation12 + $0x4] sm:$0xf]
    %v293 = vld [vmem:[#allocation12 + $0x8] sm:$0xf]
    %v294 = vld [vmem:[#allocation12 + $0xc] sm:$0xf]
    %v295 = vld [vmem:[#allocation12 + $0x10] sm:$0xf]
    %v296 = vld [vmem:[#allocation12 + $0x14] sm:$0xf]
    %v297 = vld [vmem:[#allocation12 + $0x18] sm:$0xf]
    %v298 = vld [vmem:[#allocation12 + $0x1c] sm:$0xf]
    %v299 = vld [vmem:[#allocation12 + $0x20] sm:$0xf]
    %v300 = vld [vmem:[#allocation12 + $0x24] sm:$0xf]
    %v301 = vld [vmem:[#allocation12 + $0x28] sm:$0xf]
    %v302 = vld [vmem:[#allocation12 + $0x2c] sm:$0xf]
    %v303 = vld [vmem:[#allocation12 + $0x30] sm:$0xf]
    %v304 = vld [vmem:[#allocation12 + $0x34] sm:$0xf]
    %v305 = vld [vmem:[#allocation12 + $0x38] sm:$0xf]
    %v306 = vld [vmem:[#allocation12 + $0x3c] sm:$0xf]
    %v307 = vld [vmem:[#allocation12 + $0x40] sm:$0xf]
    %v308 = vld [vmem:[#allocation12 + $0x44] sm:$0xf]
    %v309 = vld [vmem:[#allocation12 + $0x48] sm:$0xf]
    %v310 = vld [vmem:[#allocation12 + $0x4c] sm:$0xf]
    %v311 = vld [vmem:[#allocation12 + $0x50] sm:$0xf]
    %v312 = vld [vmem:[#allocation12 + $0x54] sm:$0xf]
    %v313 = vld [vmem:[#allocation12 + $0x58] sm:$0xf]
    %v314 = vld [vmem:[#allocation12 + $0x5c] sm:$0xf]
    %v315 = vld [vmem:[#allocation12 + $0x60] sm:$0xf]
    %v316 = vld [vmem:[#allocation12 + $0x64] sm:$0xf]
    %v317 = vld [vmem:[#allocation12 + $0x68] sm:$0xf]
    %v318 = vld [vmem:[#allocation12 + $0x6c] sm:$0xf]
    %v319 = vld [vmem:[#allocation12 + $0x70] sm:$0xf]
    %v320 = vld [vmem:[#allocation12 + $0x74] sm:$0xf]
    %v321 = vld [vmem:[#allocation12 + $0x78] sm:$0xf]
    %v322 = vld [vmem:[#allocation12 + $0x7c] sm:$0xf]
    %v325 = vunpack.c.l.b16 %v289
    %v326 = vunpack.c.h.b16 %v289
    %v327 = vunpack.c.l.b16 %v290
    %v328 = vunpack.c.h.b16 %v290
    %v329 = vpack.c.b16 %v327, %v325
    %v330 = vpack.c.b16 %v328, %v326
    %v365 = vunpack.c.l.b16 %v291
    %v366 = vunpack.c.l.b16 %v292
    %v367 = vunpack.c.l.b16 %v293
    %v368 = vunpack.c.l.b16 %v294
    %v369 = vunpack.c.l.b16 %v295
    %v370 = vunpack.c.l.b16 %v296
    %v371 = vunpack.c.l.b16 %v297
    %v372 = vunpack.c.l.b16 %v298
    %v373 = vunpack.c.l.b16 %v299
    %v374 = vunpack.c.l.b16 %v300
    %v375 = vunpack.c.l.b16 %v301
    %v376 = vunpack.c.l.b16 %v302
    %v377 = vunpack.c.l.b16 %v303
    %v378 = vunpack.c.l.b16 %v304
    %v379 = vunpack.c.l.b16 %v305
    %v380 = vunpack.c.l.b16 %v306
    %v381 = vunpack.c.l.b16 %v307
    %v382 = vunpack.c.l.b16 %v308
    %v383 = vunpack.c.l.b16 %v309
    %v384 = vunpack.c.l.b16 %v310
    %v385 = vunpack.c.l.b16 %v311
    %v386 = vunpack.c.l.b16 %v312
    %v387 = vunpack.c.l.b16 %v313
    %v388 = vunpack.c.l.b16 %v314
    %v389 = vunpack.c.l.b16 %v315
    %v390 = vunpack.c.l.b16 %v316
    %v391 = vunpack.c.l.b16 %v317
    %v392 = vunpack.c.l.b16 %v318
    %v393 = vunpack.c.l.b16 %v319
    %v394 = vunpack.c.l.b16 %v320
    %v395 = vunpack.c.l.b16 %v321
    %v396 = vunpack.c.l.b16 %v322
    %v397 = vpack.c.b16 %v366, %v365
    %v398 = vpack.c.b16 %v368, %v367
    %v399 = vpack.c.b16 %v370, %v369
    %v400 = vpack.c.b16 %v372, %v371
    %v401 = vpack.c.b16 %v374, %v373
    %v402 = vpack.c.b16 %v376, %v375
    %v403 = vpack.c.b16 %v378, %v377
    %v404 = vpack.c.b16 %v380, %v379
    %v405 = vpack.c.b16 %v382, %v381
    %v406 = vpack.c.b16 %v384, %v383
    %v407 = vpack.c.b16 %v386, %v385
    %v408 = vpack.c.b16 %v388, %v387
    %v409 = vpack.c.b16 %v390, %v389
    %v410 = vpack.c.b16 %v392, %v391
    %v411 = vpack.c.b16 %v394, %v393
    %v412 = vpack.c.b16 %v396, %v395
    %429 = vmatpush.bf16.msra.mxu0 %v404
    %430 = vmatpush.bf16.msra.mxu0 %v403
    %431 = vmatpush.bf16.msra.mxu0 %v402
    %432 = vmatpush.bf16.msra.mxu0 %v401
    %433 = vmatpush.bf16.msra.mxu0 %v400
    %434 = vmatpush.bf16.msra.mxu0 %v399
    %435 = vmatpush.bf16.msra.mxu0 %v398
    %436 = vmatpush.bf16.msra.mxu0 %v397
    %437 = vmatmul.bf16.gmra.mxu0 %v329
    %v438 = vpop.f32.mrf.mxu0
    %v439 = vadd.f32 0.0, %v438
    %v440 = vpop.f32.mrf.mxu0
    %v441 = vadd.f32 0.0, %v440
    %442 = vdwg.mxu0
    %443 = vmatpush.bf16.msra.mxu0 %v412
    %444 = vmatpush.bf16.msra.mxu0 %v411
    %445 = vmatpush.bf16.msra.mxu0 %v410
    %446 = vmatpush.bf16.msra.mxu0 %v409
    %447 = vmatpush.bf16.msra.mxu0 %v408
    %448 = vmatpush.bf16.msra.mxu0 %v407
    %449 = vmatpush.bf16.msra.mxu0 %v406
    %450 = vmatpush.bf16.msra.mxu0 %v405
    %451 = vmatmul.bf16.gmra.mxu0 %v330
    %v452 = vpop.f32.mrf.mxu0
    %v453 = vadd.f32 %v439, %v452
    %v454 = vpop.f32.mrf.mxu0
    %v455 = vadd.f32 %v441, %v454
    %456 = vdwg.mxu0
    %v457 = vmul.f32 %v453, %v453
    %v458 = vmul.f32 %v455, %v455
    %v459 = vld [vmem:[#allocation14] sm:$0xff]
    %v460 = vld [vmem:[#allocation14 + $0x8] sm:$0xff]
    %v461 = vld [vmem:[#allocation14 + $0x10] sm:$0xff]
    %v462 = vld [vmem:[#allocation14 + $0x18] sm:$0xff]
    %v463 = vld [vmem:[#allocation14 + $0x20] sm:$0xff]
    %v464 = vld [vmem:[#allocation14 + $0x28] sm:$0xff]
    %v465 = vld [vmem:[#allocation14 + $0x30] sm:$0xff]
    %v466 = vld [vmem:[#allocation14 + $0x38] sm:$0xff]
    %v467 = vld [vmem:[#allocation14 + $0x40] sm:$0xff]
    %v468 = vld [vmem:[#allocation14 + $0x48] sm:$0xff]
    %v469 = vld [vmem:[#allocation14 + $0x50] sm:$0xff]
    %v470 = vld [vmem:[#allocation14 + $0x58] sm:$0xff]
    %v471 = vld [vmem:[#allocation14 + $0x60] sm:$0xff]
    %v472 = vld [vmem:[#allocation14 + $0x68] sm:$0xff]
    %v473 = vld [vmem:[#allocation14 + $0x70] sm:$0xff]
    %v474 = vld [vmem:[#allocation14 + $0x78] sm:$0xff]
    %475 = vmatpush.msra.mxu0 %v474
    %476 = vmatpush.msra.mxu0 %v473
    %477 = vmatpush.msra.mxu0 %v472
    %478 = vmatpush.msra.mxu0 %v471
    %479 = vmatpush.msra.mxu0 %v470
    %480 = vmatpush.msra.mxu0 %v469
    %481 = vmatpush.msra.mxu0 %v468
    %482 = vmatpush.msra.mxu0 %v467
    %483 = vmatpush.msra.mxu0 %v466
    %484 = vmatpush.msra.mxu0 %v465
    %485 = vmatpush.msra.mxu0 %v464
    %486 = vmatpush.msra.mxu0 %v463
    %487 = vmatpush.msra.mxu0 %v462
    %488 = vmatpush.msra.mxu0 %v461
    %489 = vmatpush.msra.mxu0 %v460
    %490 = vmatpush.msra.mxu0 %v459
    %491 = vmatmul.f32.gmra.mxu0 %v457
    %v492 = vpop.f32.mrf.mxu0
    %v493 = vadd.f32 0.0, %v492
    %494 = vmatmul.f32.gmra.mxu0 %v458
    %v495 = vpop.f32.mrf.mxu0
    %v496 = vadd.f32 0.0, %v495
    %497 = vdwg.mxu0
    %v498 = vmax.f32 %v493, 1e-24
    %v499 = vmax.f32 %v496, 1e-24
    %v500 = vrsqrt.pop %v498
    %v501 = vmul.f32 %v500, %v498
    %v502 = vmul.f32 %v501, %v500
    %v503 = vmul.f32 0.5, %v502
    %v504 = vsub.f32 1.5, %v503
    %v505 = vmul.f32 %v500, %v504
    %vm506 = vweird.f32 %v498
    %vm507 = vweird.f32 %v500
    %vm508 = vmor %vm506, %vm507
    %v509 = vsel %vm508, %v500, %v505
    %v510 = vrsqrt.pop %v499
    %v511 = vmul.f32 %v510, %v499
    %v512 = vmul.f32 %v511, %v510
    %v513 = vmul.f32 0.5, %v512
    %v514 = vsub.f32 1.5, %v513
    %v515 = vmul.f32 %v510, %v514
    %vm516 = vweird.f32 %v499
    %vm517 = vweird.f32 %v510
    %vm518 = vmor %vm516, %vm517
    %v519 = vsel %vm518, %v510, %v515
    %v520 = vld [vmem:[#allocation16] sm:$0xff]
    %v521 = vld [vmem:[#allocation16 + $0x8] sm:$0xff]
    %v522 = vld [vmem:[#allocation16 + $0x10] sm:$0xff]
    %v523 = vld [vmem:[#allocation16 + $0x18] sm:$0xff]
    %v524 = vld [vmem:[#allocation16 + $0x20] sm:$0xff]
    %v525 = vld [vmem:[#allocation16 + $0x28] sm:$0xff]
    %v526 = vld [vmem:[#allocation16 + $0x30] sm:$0xff]
    %v527 = vld [vmem:[#allocation16 + $0x38] sm:$0xff]
    %v528 = vld [vmem:[#allocation16 + $0x40] sm:$0xff]
    %v529 = vld [vmem:[#allocation16 + $0x48] sm:$0xff]
    %v530 = vld [vmem:[#allocation16 + $0x50] sm:$0xff]
    %v531 = vld [vmem:[#allocation16 + $0x58] sm:$0xff]
    %v532 = vld [vmem:[#allocation16 + $0x60] sm:$0xff]
    %v533 = vld [vmem:[#allocation16 + $0x68] sm:$0xff]
    %v534 = vld [vmem:[#allocation16 + $0x70] sm:$0xff]
    %v535 = vld [vmem:[#allocation16 + $0x78] sm:$0xff]
    %536 = vmatpush.msra.mxu0 %v535
    %537 = vmatpush.msra.mxu0 %v534
    %538 = vmatpush.msra.mxu0 %v533
    %539 = vmatpush.msra.mxu0 %v532
    %540 = vmatpush.msra.mxu0 %v531
    %541 = vmatpush.msra.mxu0 %v530
    %542 = vmatpush.msra.mxu0 %v529
    %543 = vmatpush.msra.mxu0 %v528
    %544 = vmatpush.msra.mxu0 %v527
    %545 = vmatpush.msra.mxu0 %v526
    %546 = vmatpush.msra.mxu0 %v525
    %547 = vmatpush.msra.mxu0 %v524
    %548 = vmatpush.msra.mxu0 %v523
    %549 = vmatpush.msra.mxu0 %v522
    %550 = vmatpush.msra.mxu0 %v521
    %551 = vmatpush.msra.mxu0 %v520
    %552 = vmatmul.f32.gmra.mxu0 %v509
    %v553 = vpop.f32.mrf.mxu0
    %v554 = vadd.f32 0.0, %v553
    %555 = vmatmul.f32.gmra.mxu0 %v519
    %v556 = vpop.f32.mrf.mxu0
    %v557 = vadd.f32 0.0, %v556
    %558 = vdwg.mxu0
    %v559 = vmul.f32 %v453, %v554
    %v560 = vmul.f32 %v455, %v557
    %561 = vst [vmem:[%s8] sm:$0xff] %v559
    %562 = vst [vmem:[%s8 + $0x8] sm:$0xff] %v560
    // Predicated region
    $region34: #{forward.2} parent=1 // pred_check
      _
    $region35: #{forward.2} parent=1 // pred_check_branch
      %564 = sbr.rel (0) target = $region37
    $region36: #{forward.2} parent=1 // pred_region
      _
    $region37: #{forward.2} parent=1 // pred_fallthru
      _
    // Predicated region
    $region38: #{forward.2} parent=1 // pred_check
      _
    $region39: #{forward.2} parent=1 // pred_check_branch
      %566 = sbr.rel (0) target = $region41
    $region40: #{forward.2} parent=1 // pred_region
      _
    $region41: #{forward.2} parent=1 // pred_fallthru
      _
    %567 = vsyncpa [#allocation13], 1
    %568 = vsyncpa [#allocation15], 1

</llo_original>
